<compile_context>
chip_gen: v5e
topology: v5e:2x2
jax: 0.10.0
libtpu: 0.0.40
codegen_flags: <defaults>
</compile_context>

<pallas_src>
import functools

import jax
import jax.numpy as jnp
import numpy as np
from jax.experimental import pallas as pl
from jax.experimental.pallas import tpu as pltpu

N_LAYERS = 4
KERNEL_SIZE = 3


def _tcn_kernel(x_ref, w_ref, b_ref, o_ref, *, length, batch, n_layers):
    """x_ref/o_ref: (B, C, L).  w_ref: (n_layers, C, 3*C).  b_ref: (n_layers, C, 1)."""
    bl = batch * length

    # Per-lane position within its length-L batch segment, built without any modulo
    # (no power-of-two assumption on L) and hoisted out of the layer loop.
    seg_t = jax.lax.broadcasted_iota(jnp.int32, (1, length), 1)          # (1, L)
    local_t = jnp.concatenate([seg_t] * batch, axis=1) if batch > 1 else seg_t

    # Assemble the lane-dense (C, B*L) activation slab from B lane-aligned (C, L)
    # slices of the (B, C, L) input block — the layout change happens in-kernel.
    if batch > 1:
        out = jnp.concatenate([x_ref[bi] for bi in range(batch)], axis=1)  # (C, B*L)
    else:
        out = x_ref[0]

    for layer in range(n_layers):
        d = 1 << layer            # dilation == per-side zero padding for kernel_size=3
        res = out

        # Tap k=0 needs x[t-d]; tap k=2 needs x[t+d]; zero outside [0, L) per segment
        # (handles both zero-padding and batch-segment boundaries).
        left = pltpu.roll(out, d, 1)                           # left[:, t]  = out[:, t-d] (wrapped)
        left = jnp.where(local_t >= d, left, 0.0)
        right = pltpu.roll(out, (bl - d) % bl, 1)              # right[:, t] = out[:, t+d] (wrapped)
        right = jnp.where(local_t < length - d, right, 0.0)

        # One MXU matmul per layer: the 3 taps are fused into the contraction dim.
        # (Latency- not throughput-bound at C=8; kept because it scales with C and
        #  the kernel is overhead-bound at this size.)
        rhs = jnp.concatenate([left, out, right], axis=0)      # (3*C, B*L)
        acc = jnp.dot(w_ref[layer], rhs, preferred_element_type=jnp.float32)  # (C, B*L)

        # out = relu(conv + bias) + residual
        out = jnp.maximum(acc + b_ref[layer], 0.0) + res

    # Write back per batch segment: lane-aligned, unmasked (C, L) stores.
    for bi in range(batch):
        o_ref[bi] = out[:, bi * length:(bi + 1) * length]


def dilated_tcn_pallas(x, weights, biases):
    """x: (B, C, L) f32.  weights: list of (C, C, K).  biases: list of (C,)."""
    B, C, L = x.shape
    if x.dtype != jnp.float32:
        x = x.astype(jnp.float32)

    # Fuse taps into the contraction dim: (C_out, C_in, K) -> (C_out, K*C_in), k-major
    # so it matches the in-kernel [left | mid | right] RHS row order.
    # (In a real model this weight repack is done once at load time, not per call.)
    w_fused = jnp.stack(
        [jnp.transpose(wl, (0, 2, 1)).reshape(C, KERNEL_SIZE * C) for wl in weights]
    ).astype(jnp.float32)                                   # (n_layers, C, K*C)
    b = jnp.stack(biases).astype(jnp.float32)[:, :, None]   # (n_layers, C, 1)

    # ---- VMEM budget guard (scale-up safety: v7x 64 MiB physical, v5e 16 MiB default) ----
    slab_bytes = C * B * L * 4
    live_slabs = 12  # slab + res + left + right + rhs(~3 slabs) + acc + headroom
    est_bytes = (live_slabs * slab_bytes            # in-kernel live values
                 + 2 * B * C * L * 4                # x / o whole-array VMEM blocks
                 + w_fused.size * 4 + b.size * 4)
    if est_bytes > 48 * 1024 * 1024:
        # ~3/4 of v7x's 64 MiB physical VMEM: the no-grid, whole-problem-resident design
        # stops being appropriate here.  Introduce a 1-D "parallel" grid over whole
        # batch/length segments (tile width a multiple of L) before scaling this far.
        raise ValueError(
            f"_DilatedTCN Pallas kernel would need ~{est_bytes / 2**20:.1f} MiB of VMEM; "
            "add a batch/length-segment grid before scaling this far.")
    vmem_limit = min(max(32 * 1024 * 1024, 2 * est_bytes), 100 * 1024 * 1024)

    kernel = functools.partial(_tcn_kernel, length=L, batch=B, n_layers=N_LAYERS)

    # Single invocation, no grid: all operands are whole-array VMEM blocks.
    return pl.pallas_call(
        kernel,
        out_shape=jax.ShapeDtypeStruct((B, C, L), jnp.float32),
        in_specs=[
            pl.BlockSpec(memory_space=pltpu.MemorySpace.VMEM),   # x (B, C, L)
            pl.BlockSpec(memory_space=pltpu.MemorySpace.VMEM),   # fused weights
            pl.BlockSpec(memory_space=pltpu.MemorySpace.VMEM),   # biases
        ],
        out_specs=pl.BlockSpec(memory_space=pltpu.MemorySpace.VMEM),
        compiler_params=pltpu.CompilerParams(vmem_limit_bytes=vmem_limit),
        # input_output_aliases={0: 0},  # enable when the caller can donate x
    )(x, w_fused, b)


def dilated_tcn_reference(x, weights, biases):
    """Pure-JAX reference matching the PyTorch forward semantics."""
    out = x
    for i, (wl, bl) in enumerate(zip(weights, biases)):
        d = 2 ** i
        conv = jax.lax.conv_general_dilated(
            out, wl,
            window_strides=(1,),
            padding=[(d, d)],
            rhs_dilation=(d,),
            dimension_numbers=("NCH", "OIH", "NCH"),
        )
        conv = conv + bl[None, :, None]
        out = jnp.maximum(conv, 0.0) + out
    return out


if __name__ == "__main__":
    B, C, L = 2, 8, 128  # (batch, channels, sequence length)

    key = jax.random.PRNGKey(0)
    kx, kw, kb = jax.random.split(key, 3)

    x = jax.random.normal(kx, (B, C, L), dtype=jnp.float32)

    # Deterministic Conv1d-style init: uniform(+-1/sqrt(fan_in)), fan_in = C*K
    bound = 1.0 / np.sqrt(C * KERNEL_SIZE)
    wkeys = jax.random.split(kw, N_LAYERS)
    bkeys = jax.random.split(kb, N_LAYERS)
    weights = [
        jax.random.uniform(wkeys[i], (C, C, KERNEL_SIZE), jnp.float32, -bound, bound)
        for i in range(N_LAYERS)
    ]
    biases = [
        jax.random.uniform(bkeys[i], (C,), jnp.float32, -bound, bound)
        for i in range(N_LAYERS)
    ]

    fwd = jax.jit(dilated_tcn_pallas)
    out = jax.block_until_ready(fwd(x, weights, biases))

    ref = dilated_tcn_reference(x, weights, biases)
    np.testing.assert_allclose(np.asarray(out), np.asarray(ref), rtol=1e-4, atol=1e-4)

    print("KERNEL_OK")
</pallas_src>

<mosaic_0001>
module attributes {stable_mosaic.version = 11 : i64} {
  func.func @_tcn_kernel(%arg0: memref<2x8x128xf32, #tpu.memory_space<vmem>>, %arg1: memref<4x8x24xf32, #tpu.memory_space<vmem>>, %arg2: memref<4x8x1xf32, #tpu.memory_space<vmem>>, %arg3: memref<2x8x128xf32, #tpu.memory_space<vmem>>) attributes {dimension_semantics = [], scalar_prefetch = 0 : i64, scratch_operands = 0 : i64, tpu.core_type = #tpu.core_type<tc>} {
    %0 = tpu.iota {dimensions = array<i32: 1>} : vector<1x128xi32>
    %1 = tpu.concatenate %0, %0 in 1 : vector<1x128xi32>, vector<1x128xi32> -> vector<1x256xi32>
    %c0 = arith.constant 0 : index
    %c0_0 = arith.constant 0 : index
    %c0_1 = arith.constant 0 : index
    %2 = vector.load %arg0[%c0, %c0_0, %c0_1] : memref<2x8x128xf32, #tpu.memory_space<vmem>>, vector<1x8x128xf32>
    %3 = vector.shape_cast %2 : vector<1x8x128xf32> to vector<8x128xf32>
    %c1 = arith.constant 1 : index
    %c0_2 = arith.constant 0 : index
    %c0_3 = arith.constant 0 : index
    %4 = vector.load %arg0[%c1, %c0_2, %c0_3] : memref<2x8x128xf32, #tpu.memory_space<vmem>>, vector<1x8x128xf32>
    %5 = vector.shape_cast %4 : vector<1x8x128xf32> to vector<8x128xf32>
    %6 = tpu.concatenate %3, %5 in 1 : vector<8x128xf32>, vector<8x128xf32> -> vector<8x256xf32>
    %c1_i32 = arith.constant 1 : i32
    %7 = tpu.dynamic_rotate %6 by %c1_i32 dim 1 : vector<8x256xf32>, i32 -> vector<8x256xf32>
    %c1_i32_4 = arith.constant 1 : i32
    %8 = vector.broadcast %c1_i32_4 : i32 to vector<1x256xi32>
    %9 = arith.cmpi sge, %1, %8 : vector<1x256xi32>
    %cst = arith.constant 0.000000e+00 : f32
    %10 = vector.shape_cast %9 : vector<1x256xi1> to vector<1x256xi1>
    %11 = vector.broadcast %10 : vector<1x256xi1> to vector<8x256xi1>
    %12 = vector.broadcast %cst : f32 to vector<8x256xf32>
    %13 = arith.select %11, %7, %12 : vector<8x256xi1>, vector<8x256xf32>
    %c255_i32 = arith.constant 255 : i32
    %14 = tpu.dynamic_rotate %6 by %c255_i32 dim 1 : vector<8x256xf32>, i32 -> vector<8x256xf32>
    %c127_i32 = arith.constant 127 : i32
    %15 = vector.broadcast %c127_i32 : i32 to vector<1x256xi32>
    %16 = arith.cmpi slt, %1, %15 : vector<1x256xi32>
    %cst_5 = arith.constant 0.000000e+00 : f32
    %17 = vector.shape_cast %16 : vector<1x256xi1> to vector<1x256xi1>
    %18 = vector.broadcast %17 : vector<1x256xi1> to vector<8x256xi1>
    %19 = vector.broadcast %cst_5 : f32 to vector<8x256xf32>
    %20 = arith.select %18, %14, %19 : vector<8x256xi1>, vector<8x256xf32>
    %21 = tpu.concatenate %13, %6, %20 in 0 : vector<8x256xf32>, vector<8x256xf32>, vector<8x256xf32> -> vector<24x256xf32>
    %c0_6 = arith.constant 0 : index
    %c0_7 = arith.constant 0 : index
    %c0_8 = arith.constant 0 : index
    %22 = vector.load %arg1[%c0_6, %c0_7, %c0_8] : memref<4x8x24xf32, #tpu.memory_space<vmem>>, vector<1x8x24xf32>
    %23 = vector.shape_cast %22 : vector<1x8x24xf32> to vector<8x24xf32>
    %cst_9 = arith.constant dense<0.000000e+00> : vector<8x256xf32>
    %24 = tpu.matmul %23, %21, %cst_9 {dimension_numbers = #tpu.dot_dimension_numbers<[1], [0], [0], [1], [0, 0, 1, 1], [], []>} : vector<8x24xf32>, vector<24x256xf32>, vector<8x256xf32> -> vector<8x256xf32>
    %c0_10 = arith.constant 0 : index
    %c0_11 = arith.constant 0 : index
    %c0_12 = arith.constant 0 : index
    %25 = vector.load %arg2[%c0_10, %c0_11, %c0_12] : memref<4x8x1xf32, #tpu.memory_space<vmem>>, vector<1x8x1xf32>
    %26 = vector.shape_cast %25 : vector<1x8x1xf32> to vector<8x1xf32>
    %27 = vector.broadcast %26 : vector<8x1xf32> to vector<8x256xf32>
    %28 = arith.addf %24, %27 : vector<8x256xf32>
    %cst_13 = arith.constant 0.000000e+00 : f32
    %29 = vector.broadcast %cst_13 : f32 to vector<8x256xf32>
    %30 = arith.maximumf %28, %29 : vector<8x256xf32>
    %31 = arith.addf %30, %6 : vector<8x256xf32>
    %c2_i32 = arith.constant 2 : i32
    %32 = tpu.dynamic_rotate %31 by %c2_i32 dim 1 : vector<8x256xf32>, i32 -> vector<8x256xf32>
    %c2_i32_14 = arith.constant 2 : i32
    %33 = vector.broadcast %c2_i32_14 : i32 to vector<1x256xi32>
    %34 = arith.cmpi sge, %1, %33 : vector<1x256xi32>
    %cst_15 = arith.constant 0.000000e+00 : f32
    %35 = vector.shape_cast %34 : vector<1x256xi1> to vector<1x256xi1>
    %36 = vector.broadcast %35 : vector<1x256xi1> to vector<8x256xi1>
    %37 = vector.broadcast %cst_15 : f32 to vector<8x256xf32>
    %38 = arith.select %36, %32, %37 : vector<8x256xi1>, vector<8x256xf32>
    %c254_i32 = arith.constant 254 : i32
    %39 = tpu.dynamic_rotate %31 by %c254_i32 dim 1 : vector<8x256xf32>, i32 -> vector<8x256xf32>
    %c126_i32 = arith.constant 126 : i32
    %40 = vector.broadcast %c126_i32 : i32 to vector<1x256xi32>
    %41 = arith.cmpi slt, %1, %40 : vector<1x256xi32>
    %cst_16 = arith.constant 0.000000e+00 : f32
    %42 = vector.shape_cast %41 : vector<1x256xi1> to vector<1x256xi1>
    %43 = vector.broadcast %42 : vector<1x256xi1> to vector<8x256xi1>
    %44 = vector.broadcast %cst_16 : f32 to vector<8x256xf32>
    %45 = arith.select %43, %39, %44 : vector<8x256xi1>, vector<8x256xf32>
    %46 = tpu.concatenate %38, %31, %45 in 0 : vector<8x256xf32>, vector<8x256xf32>, vector<8x256xf32> -> vector<24x256xf32>
    %c1_17 = arith.constant 1 : index
    %c0_18 = arith.constant 0 : index
    %c0_19 = arith.constant 0 : index
    %47 = vector.load %arg1[%c1_17, %c0_18, %c0_19] : memref<4x8x24xf32, #tpu.memory_space<vmem>>, vector<1x8x24xf32>
    %48 = vector.shape_cast %47 : vector<1x8x24xf32> to vector<8x24xf32>
    %cst_20 = arith.constant dense<0.000000e+00> : vector<8x256xf32>
    %49 = tpu.matmul %48, %46, %cst_20 {dimension_numbers = #tpu.dot_dimension_numbers<[1], [0], [0], [1], [0, 0, 1, 1], [], []>} : vector<8x24xf32>, vector<24x256xf32>, vector<8x256xf32> -> vector<8x256xf32>
    %c1_21 = arith.constant 1 : index
    %c0_22 = arith.constant 0 : index
    %c0_23 = arith.constant 0 : index
    %50 = vector.load %arg2[%c1_21, %c0_22, %c0_23] : memref<4x8x1xf32, #tpu.memory_space<vmem>>, vector<1x8x1xf32>
    %51 = vector.shape_cast %50 : vector<1x8x1xf32> to vector<8x1xf32>
    %52 = vector.broadcast %51 : vector<8x1xf32> to vector<8x256xf32>
    %53 = arith.addf %49, %52 : vector<8x256xf32>
    %cst_24 = arith.constant 0.000000e+00 : f32
    %54 = vector.broadcast %cst_24 : f32 to vector<8x256xf32>
    %55 = arith.maximumf %53, %54 : vector<8x256xf32>
    %56 = arith.addf %55, %31 : vector<8x256xf32>
    %c4_i32 = arith.constant 4 : i32
    %57 = tpu.dynamic_rotate %56 by %c4_i32 dim 1 : vector<8x256xf32>, i32 -> vector<8x256xf32>
    %c4_i32_25 = arith.constant 4 : i32
    %58 = vector.broadcast %c4_i32_25 : i32 to vector<1x256xi32>
    %59 = arith.cmpi sge, %1, %58 : vector<1x256xi32>
    %cst_26 = arith.constant 0.000000e+00 : f32
    %60 = vector.shape_cast %59 : vector<1x256xi1> to vector<1x256xi1>
    %61 = vector.broadcast %60 : vector<1x256xi1> to vector<8x256xi1>
    %62 = vector.broadcast %cst_26 : f32 to vector<8x256xf32>
    %63 = arith.select %61, %57, %62 : vector<8x256xi1>, vector<8x256xf32>
    %c252_i32 = arith.constant 252 : i32
    %64 = tpu.dynamic_rotate %56 by %c252_i32 dim 1 : vector<8x256xf32>, i32 -> vector<8x256xf32>
    %c124_i32 = arith.constant 124 : i32
    %65 = vector.broadcast %c124_i32 : i32 to vector<1x256xi32>
    %66 = arith.cmpi slt, %1, %65 : vector<1x256xi32>
    %cst_27 = arith.constant 0.000000e+00 : f32
    %67 = vector.shape_cast %66 : vector<1x256xi1> to vector<1x256xi1>
    %68 = vector.broadcast %67 : vector<1x256xi1> to vector<8x256xi1>
    %69 = vector.broadcast %cst_27 : f32 to vector<8x256xf32>
    %70 = arith.select %68, %64, %69 : vector<8x256xi1>, vector<8x256xf32>
    %71 = tpu.concatenate %63, %56, %70 in 0 : vector<8x256xf32>, vector<8x256xf32>, vector<8x256xf32> -> vector<24x256xf32>
    %c2 = arith.constant 2 : index
    %c0_28 = arith.constant 0 : index
    %c0_29 = arith.constant 0 : index
    %72 = vector.load %arg1[%c2, %c0_28, %c0_29] : memref<4x8x24xf32, #tpu.memory_space<vmem>>, vector<1x8x24xf32>
    %73 = vector.shape_cast %72 : vector<1x8x24xf32> to vector<8x24xf32>
    %cst_30 = arith.constant dense<0.000000e+00> : vector<8x256xf32>
    %74 = tpu.matmul %73, %71, %cst_30 {dimension_numbers = #tpu.dot_dimension_numbers<[1], [0], [0], [1], [0, 0, 1, 1], [], []>} : vector<8x24xf32>, vector<24x256xf32>, vector<8x256xf32> -> vector<8x256xf32>
    %c2_31 = arith.constant 2 : index
    %c0_32 = arith.constant 0 : index
    %c0_33 = arith.constant 0 : index
    %75 = vector.load %arg2[%c2_31, %c0_32, %c0_33] : memref<4x8x1xf32, #tpu.memory_space<vmem>>, vector<1x8x1xf32>
    %76 = vector.shape_cast %75 : vector<1x8x1xf32> to vector<8x1xf32>
    %77 = vector.broadcast %76 : vector<8x1xf32> to vector<8x256xf32>
    %78 = arith.addf %74, %77 : vector<8x256xf32>
    %cst_34 = arith.constant 0.000000e+00 : f32
    %79 = vector.broadcast %cst_34 : f32 to vector<8x256xf32>
    %80 = arith.maximumf %78, %79 : vector<8x256xf32>
    %81 = arith.addf %80, %56 : vector<8x256xf32>
    %c8_i32 = arith.constant 8 : i32
    %82 = tpu.dynamic_rotate %81 by %c8_i32 dim 1 : vector<8x256xf32>, i32 -> vector<8x256xf32>
    %c8_i32_35 = arith.constant 8 : i32
    %83 = vector.broadcast %c8_i32_35 : i32 to vector<1x256xi32>
    %84 = arith.cmpi sge, %1, %83 : vector<1x256xi32>
    %cst_36 = arith.constant 0.000000e+00 : f32
    %85 = vector.shape_cast %84 : vector<1x256xi1> to vector<1x256xi1>
    %86 = vector.broadcast %85 : vector<1x256xi1> to vector<8x256xi1>
    %87 = vector.broadcast %cst_36 : f32 to vector<8x256xf32>
    %88 = arith.select %86, %82, %87 : vector<8x256xi1>, vector<8x256xf32>
    %c248_i32 = arith.constant 248 : i32
    %89 = tpu.dynamic_rotate %81 by %c248_i32 dim 1 : vector<8x256xf32>, i32 -> vector<8x256xf32>
    %c120_i32 = arith.constant 120 : i32
    %90 = vector.broadcast %c120_i32 : i32 to vector<1x256xi32>
    %91 = arith.cmpi slt, %1, %90 : vector<1x256xi32>
    %cst_37 = arith.constant 0.000000e+00 : f32
    %92 = vector.shape_cast %91 : vector<1x256xi1> to vector<1x256xi1>
    %93 = vector.broadcast %92 : vector<1x256xi1> to vector<8x256xi1>
    %94 = vector.broadcast %cst_37 : f32 to vector<8x256xf32>
    %95 = arith.select %93, %89, %94 : vector<8x256xi1>, vector<8x256xf32>
    %96 = tpu.concatenate %88, %81, %95 in 0 : vector<8x256xf32>, vector<8x256xf32>, vector<8x256xf32> -> vector<24x256xf32>
    %c3 = arith.constant 3 : index
    %c0_38 = arith.constant 0 : index
    %c0_39 = arith.constant 0 : index
    %97 = vector.load %arg1[%c3, %c0_38, %c0_39] : memref<4x8x24xf32, #tpu.memory_space<vmem>>, vector<1x8x24xf32>
    %98 = vector.shape_cast %97 : vector<1x8x24xf32> to vector<8x24xf32>
    %cst_40 = arith.constant dense<0.000000e+00> : vector<8x256xf32>
    %99 = tpu.matmul %98, %96, %cst_40 {dimension_numbers = #tpu.dot_dimension_numbers<[1], [0], [0], [1], [0, 0, 1, 1], [], []>} : vector<8x24xf32>, vector<24x256xf32>, vector<8x256xf32> -> vector<8x256xf32>
    %c3_41 = arith.constant 3 : index
    %c0_42 = arith.constant 0 : index
    %c0_43 = arith.constant 0 : index
    %100 = vector.load %arg2[%c3_41, %c0_42, %c0_43] : memref<4x8x1xf32, #tpu.memory_space<vmem>>, vector<1x8x1xf32>
    %101 = vector.shape_cast %100 : vector<1x8x1xf32> to vector<8x1xf32>
    %102 = vector.broadcast %101 : vector<8x1xf32> to vector<8x256xf32>
    %103 = arith.addf %99, %102 : vector<8x256xf32>
    %cst_44 = arith.constant 0.000000e+00 : f32
    %104 = vector.broadcast %cst_44 : f32 to vector<8x256xf32>
    %105 = arith.maximumf %103, %104 : vector<8x256xf32>
    %106 = arith.addf %105, %81 : vector<8x256xf32>
    %107 = vector.extract_strided_slice %106 {offsets = [0, 0], sizes = [8, 128], strides = [1, 1]} : vector<8x256xf32> to vector<8x128xf32>
    %c0_45 = arith.constant 0 : index
    %c0_46 = arith.constant 0 : index
    %c0_47 = arith.constant 0 : index
    %108 = vector.load %arg3[%c0_45, %c0_46, %c0_47] : memref<2x8x128xf32, #tpu.memory_space<vmem>>, vector<1x8x128xf32>
    %109 = vector.shape_cast %108 : vector<1x8x128xf32> to vector<8x128xf32>
    %110 = vector.shape_cast %107 : vector<8x128xf32> to vector<1x8x128xf32>
    tpu.vector_store %arg3[%c0_45, %c0_46, %c0_47], %110 {strides = array<i32>} : memref<2x8x128xf32, #tpu.memory_space<vmem>>, vector<1x8x128xf32>,
    %111 = vector.extract_strided_slice %106 {offsets = [0, 128], sizes = [8, 128], strides = [1, 1]} : vector<8x256xf32> to vector<8x128xf32>
    %c1_48 = arith.constant 1 : index
    %c0_49 = arith.constant 0 : index
    %c0_50 = arith.constant 0 : index
    %112 = vector.load %arg3[%c1_48, %c0_49, %c0_50] : memref<2x8x128xf32, #tpu.memory_space<vmem>>, vector<1x8x128xf32>
    %113 = vector.shape_cast %112 : vector<1x8x128xf32> to vector<8x128xf32>
    %114 = vector.shape_cast %111 : vector<8x128xf32> to vector<1x8x128xf32>
    tpu.vector_store %arg3[%c1_48, %c0_49, %c0_50], %114 {strides = array<i32>} : memref<2x8x128xf32, #tpu.memory_space<vmem>>, vector<1x8x128xf32>,
    return
  }
}

</mosaic_0001>

<llo_original>
// kernel: dilated_tcn_pallas.1
$region0: #{dilated_tcn_pallas.1}
  #allocation0 [shape = 'u32[]', space=smem, size = 0x4, offset = 0x4, fixed_abs, tag = 'smem constant byte address 0x4 - core index']
  #allocation1 [shape = 'u32[72,128]{1,0:T(1,128)}', space=vmem, size = 0x9000, scoped, tag = 'internal scratch']
  %s0 = inlined_call_operand.vmem [shape: f32[2,8,128], index: 0, kind: input, shape index: {}]
  %s1 = inlined_call_operand.vmem [shape: f32[4,8,24], index: 1, kind: input, shape index: {}]
  %s2 = inlined_call_operand.vmem [shape: f32[4,8,1], index: 2, kind: input, shape index: {}]
  %s3 = inlined_call_operand.hbm [shape: f32[2,8,128], index: 3, kind: output, shape index: {}]
  %s4 = sld [smem:[#allocation0]]
  $region22: #{dilated_tcn_pallas.1} parent=0
    _
  %s6 = ssub.s32 1, %s4
  %s7 = scalar_select 0, %s6, %s4
  $region1: #{dilated_tcn_pallas.1} parent=0
    #allocation2 [shape = 'u8[8192]{0}', space=vmem, size = 0x2000, scoped, tag = 'output window, operand 0, single buffered']
    #allocation3 [shape = 's32[1]{0}', space=sflag, size = 0x4, scoped, tag = 'scoped memory for dilated_tcn_pallas.1']
    %8 = vsyncpa [#allocation3], 0
    // Predicated region
    $region2: #{dilated_tcn_pallas.1} parent=1 // pred_check
      _
    $region3: #{dilated_tcn_pallas.1} parent=1 // pred_check_branch
      %10 = sbr.rel (0) target = $region5
    $region4: #{dilated_tcn_pallas.1} parent=1 // pred_region
      _
    $region5: #{dilated_tcn_pallas.1} parent=1 // pred_fallthru
      _
    // Predicated region
    $region6: #{dilated_tcn_pallas.1} parent=1 // pred_check
      _
    $region7: #{dilated_tcn_pallas.1} parent=1 // pred_check_branch
      %12 = sbr.rel (0) target = $region9
    $region8: #{dilated_tcn_pallas.1} parent=1 // pred_region
      _
    $region9: #{dilated_tcn_pallas.1} parent=1 // pred_fallthru
      _
    // Predicated region
    $region10: #{dilated_tcn_pallas.1} parent=1 // pred_check
      _
    $region11: #{dilated_tcn_pallas.1} parent=1 // pred_check_branch
      %14 = sbr.rel (0) target = $region13
    $region12: #{dilated_tcn_pallas.1} parent=1 // pred_region
      _
    $region13: #{dilated_tcn_pallas.1} parent=1 // pred_fallthru
      _
    %v15 = vlaneseq
    %v16 = vand.u32 %v15, 127
    %v17 = vld [vmem:[%s0] sm:$0xff]
    %s18 = scalar_lea.vmem %s0, 8
    %v19 = vld [vmem:[%s18] sm:$0xff]
    %20 = vrot.lane.b32.xlu0 %v17, 1
    %v21 = vpop.permute.xlu0 %20
    %22 = vrot.lane.b32.xlu0 %v19, 1
    %v23 = vpop.permute.xlu0 %22
    %vm24 = vcmp.lt.s32.totalorder %v16, 1
    %v25 = vsel %vm24, %v21, %v23
    %v26 = vsel %vm24, %v23, %v21
    %vm27 = vcmp.ge.s32.totalorder %v16, 1
    %v28 = vsel %vm27, 1, 0
    %v29 = vperm.slane %v28, 0
    %vm30 = vcmp.eq.s32.totalorder %v29, 1
    %v31 = vsel %vm30, %v26, 0.0
    %v32 = vsel %vm30, %v25, 0.0
    %33 = vrot.lane.b32.xlu0 %v17, 127
    %v34 = vpop.permute.xlu0 %33
    %35 = vrot.lane.b32.xlu0 %v19, 127
    %v36 = vpop.permute.xlu0 %35
    %vm37 = vcmp.lt.s32.totalorder %v16, 127
    %v38 = vsel %vm37, %v34, %v36
    %v39 = vsel %vm37, %v36, %v34
    %v40 = vsel %vm37, 1, 0
    %v41 = vperm.slane %v40, 0
    %vm42 = vcmp.eq.s32.totalorder %v41, 1
    %v43 = vsel %vm42, %v38, 0.0
    %v44 = vsel %vm42, %v39, 0.0
    %v45 = vld [vmem:[%s1] sm:$0xff]
    %v46 = vld [vmem:[%s2] sm:$0xff]
    %48 = vset.pattern.permute.xlu0 0
    %49 = vperm.xlu0 %48, %v46
    %v50 = vpop.permute.xlu0 %49
    %vm52 = vcmask 195584
    %v54 = vsel %vm52, %v45, 0
    %56 = vmatpush.msra.mxu0 0.0
    %57 = vmatpush.msra.mxu0 0.0
    %58 = vmatpush.msra.mxu0 0.0
    %59 = vmatpush.msra.mxu0 0.0
    %60 = vmatpush.msra.mxu0 0.0
    %61 = vmatpush.msra.mxu0 0.0
    %62 = vmatpush.msra.mxu0 0.0
    %63 = vmatpush.msra.mxu0 0.0
    %64 = vmatpush.msra.mxu0 0.0
    %65 = vmatpush.msra.mxu0 0.0
    %66 = vmatpush.msra.mxu0 0.0
    %67 = vmatpush.msra.mxu0 0.0
    %68 = vmatpush.msra.mxu0 0.0
    %69 = vmatpush.msra.mxu0 %v43
    %70 = vmatpush.msra.mxu0 %v17
    %71 = vmatpush.msra.mxu0 %v31
    %72 = vmatmul.f32.gmra.mxu0 %v54
    %v73 = vpop.f32.mrf.mxu0
    %v74 = vadd.f32 %v50, %v73
    %75 = vdwg.mxu0
    %76 = vmatpush.msra.mxu0 0.0
    %77 = vmatpush.msra.mxu0 0.0
    %78 = vmatpush.msra.mxu0 0.0
    %79 = vmatpush.msra.mxu0 0.0
    %80 = vmatpush.msra.mxu0 0.0
    %81 = vmatpush.msra.mxu0 0.0
    %82 = vmatpush.msra.mxu0 0.0
    %83 = vmatpush.msra.mxu0 0.0
    %84 = vmatpush.msra.mxu0 0.0
    %85 = vmatpush.msra.mxu0 0.0
    %86 = vmatpush.msra.mxu0 0.0
    %87 = vmatpush.msra.mxu0 0.0
    %88 = vmatpush.msra.mxu0 0.0
    %89 = vmatpush.msra.mxu0 %v44
    %90 = vmatpush.msra.mxu0 %v19
    %91 = vmatpush.msra.mxu0 %v32
    %92 = vmatmul.f32.gmra.mxu0 %v54
    %v93 = vpop.f32.mrf.mxu0
    %v94 = vadd.f32 %v50, %v93
    %95 = vdwg.mxu0
    %v96 = vmax.f32 %v74, 0.0
    %v97 = vmax.f32 %v94, 0.0
    %v98 = vadd.f32 %v96, %v17
    %v99 = vadd.f32 %v97, %v19
    %100 = vrot.lane.b32.xlu0 %v98, 2
    %v101 = vpop.permute.xlu0 %100
    %102 = vrot.lane.b32.xlu0 %v99, 2
    %v103 = vpop.permute.xlu0 %102
    %vm104 = vcmp.lt.s32.totalorder %v16, 2
    %v105 = vsel %vm104, %v101, %v103
    %v106 = vsel %vm104, %v103, %v101
    %vm107 = vcmp.ge.s32.totalorder %v16, 2
    %v108 = vsel %vm107, 1, 0
    %v109 = vperm.slane %v108, 0
    %vm110 = vcmp.eq.s32.totalorder %v109, 1
    %v111 = vsel %vm110, %v106, 0.0
    %v112 = vsel %vm110, %v105, 0.0
    %113 = vrot.lane.b32.xlu0 %v98, 126
    %v114 = vpop.permute.xlu0 %113
    %115 = vrot.lane.b32.xlu0 %v99, 126
    %v116 = vpop.permute.xlu0 %115
    %vm117 = vcmp.lt.s32.totalorder %v16, 126
    %v118 = vsel %vm117, %v114, %v116
    %v119 = vsel %vm117, %v116, %v114
    %v120 = vsel %vm117, 1, 0
    %v121 = vperm.slane %v120, 0
    %vm122 = vcmp.eq.s32.totalorder %v121, 1
    %v123 = vsel %vm122, %v118, 0.0
    %v124 = vsel %vm122, %v119, 0.0
    %s125 = scalar_lea.vmem %s1, 8
    %v126 = vld [vmem:[%s125] sm:$0xff]
    %s127 = scalar_lea.vmem %s2, 8
    %v128 = vld [vmem:[%s127] sm:$0xff]
    %130 = vset.pattern.permute.xlu0 0
    %131 = vperm.xlu0 %130, %v128
    %v132 = vpop.permute.xlu0 %131
    %v135 = vsel %vm52, %v126, 0
    %137 = vmatpush.msra.mxu0 0.0
    %138 = vmatpush.msra.mxu0 0.0
    %139 = vmatpush.msra.mxu0 0.0
    %140 = vmatpush.msra.mxu0 0.0
    %141 = vmatpush.msra.mxu0 0.0
    %142 = vmatpush.msra.mxu0 0.0
    %143 = vmatpush.msra.mxu0 0.0
    %144 = vmatpush.msra.mxu0 0.0
    %145 = vmatpush.msra.mxu0 0.0
    %146 = vmatpush.msra.mxu0 0.0
    %147 = vmatpush.msra.mxu0 0.0
    %148 = vmatpush.msra.mxu0 0.0
    %149 = vmatpush.msra.mxu0 0.0
    %150 = vmatpush.msra.mxu0 %v123
    %151 = vmatpush.msra.mxu0 %v98
    %152 = vmatpush.msra.mxu0 %v111
    %153 = vmatmul.f32.gmra.mxu0 %v135
    %v154 = vpop.f32.mrf.mxu0
    %v155 = vadd.f32 %v132, %v154
    %156 = vdwg.mxu0
    %157 = vmatpush.msra.mxu0 0.0
    %158 = vmatpush.msra.mxu0 0.0
    %159 = vmatpush.msra.mxu0 0.0
    %160 = vmatpush.msra.mxu0 0.0
    %161 = vmatpush.msra.mxu0 0.0
    %162 = vmatpush.msra.mxu0 0.0
    %163 = vmatpush.msra.mxu0 0.0
    %164 = vmatpush.msra.mxu0 0.0
    %165 = vmatpush.msra.mxu0 0.0
    %166 = vmatpush.msra.mxu0 0.0
    %167 = vmatpush.msra.mxu0 0.0
    %168 = vmatpush.msra.mxu0 0.0
    %169 = vmatpush.msra.mxu0 0.0
    %170 = vmatpush.msra.mxu0 %v124
    %171 = vmatpush.msra.mxu0 %v99
    %172 = vmatpush.msra.mxu0 %v112
    %173 = vmatmul.f32.gmra.mxu0 %v135
    %v174 = vpop.f32.mrf.mxu0
    %v175 = vadd.f32 %v132, %v174
    %176 = vdwg.mxu0
    %v177 = vmax.f32 %v155, 0.0
    %v178 = vmax.f32 %v175, 0.0
    %v179 = vadd.f32 %v177, %v98
    %v180 = vadd.f32 %v178, %v99
    %181 = vrot.lane.b32.xlu0 %v179, 4
    %v182 = vpop.permute.xlu0 %181
    %183 = vrot.lane.b32.xlu0 %v180, 4
    %v184 = vpop.permute.xlu0 %183
    %vm185 = vcmp.lt.s32.totalorder %v16, 4
    %v186 = vsel %vm185, %v182, %v184
    %v187 = vsel %vm185, %v184, %v182
    %vm188 = vcmp.ge.s32.totalorder %v16, 4
    %v189 = vsel %vm188, 1, 0
    %v190 = vperm.slane %v189, 0
    %vm191 = vcmp.eq.s32.totalorder %v190, 1
    %v192 = vsel %vm191, %v187, 0.0
    %v193 = vsel %vm191, %v186, 0.0
    %194 = vrot.lane.b32.xlu0 %v179, 124
    %v195 = vpop.permute.xlu0 %194
    %196 = vrot.lane.b32.xlu0 %v180, 124
    %v197 = vpop.permute.xlu0 %196
    %vm198 = vcmp.lt.s32.totalorder %v16, 124
    %v199 = vsel %vm198, %v195, %v197
    %v200 = vsel %vm198, %v197, %v195
    %v201 = vsel %vm198, 1, 0
    %v202 = vperm.slane %v201, 0
    %vm203 = vcmp.eq.s32.totalorder %v202, 1
    %v204 = vsel %vm203, %v199, 0.0
    %v205 = vsel %vm203, %v200, 0.0
    %s206 = scalar_lea.vmem %s1, 16
    %v207 = vld [vmem:[%s206] sm:$0xff]
    %s208 = scalar_lea.vmem %s2, 16
    %v209 = vld [vmem:[%s208] sm:$0xff]
    %211 = vset.pattern.permute.xlu0 0
    %212 = vperm.xlu0 %211, %v209
    %v213 = vpop.permute.xlu0 %212
    %v216 = vsel %vm52, %v207, 0
    %218 = vmatpush.msra.mxu0 0.0
    %219 = vmatpush.msra.mxu0 0.0
    %220 = vmatpush.msra.mxu0 0.0
    %221 = vmatpush.msra.mxu0 0.0
    %222 = vmatpush.msra.mxu0 0.0
    %223 = vmatpush.msra.mxu0 0.0
    %224 = vmatpush.msra.mxu0 0.0
    %225 = vmatpush.msra.mxu0 0.0
    %226 = vmatpush.msra.mxu0 0.0
    %227 = vmatpush.msra.mxu0 0.0
    %228 = vmatpush.msra.mxu0 0.0
    %229 = vmatpush.msra.mxu0 0.0
    %230 = vmatpush.msra.mxu0 0.0
    %231 = vmatpush.msra.mxu0 %v204
    %232 = vmatpush.msra.mxu0 %v179
    %233 = vmatpush.msra.mxu0 %v192
    %234 = vmatmul.f32.gmra.mxu0 %v216
    %v235 = vpop.f32.mrf.mxu0
    %v236 = vadd.f32 %v213, %v235
    %237 = vdwg.mxu0
    %238 = vmatpush.msra.mxu0 0.0
    %239 = vmatpush.msra.mxu0 0.0
    %240 = vmatpush.msra.mxu0 0.0
    %241 = vmatpush.msra.mxu0 0.0
    %242 = vmatpush.msra.mxu0 0.0
    %243 = vmatpush.msra.mxu0 0.0
    %244 = vmatpush.msra.mxu0 0.0
    %245 = vmatpush.msra.mxu0 0.0
    %246 = vmatpush.msra.mxu0 0.0
    %247 = vmatpush.msra.mxu0 0.0
    %248 = vmatpush.msra.mxu0 0.0
    %249 = vmatpush.msra.mxu0 0.0
    %250 = vmatpush.msra.mxu0 0.0
    %251 = vmatpush.msra.mxu0 %v205
    %252 = vmatpush.msra.mxu0 %v180
    %253 = vmatpush.msra.mxu0 %v193
    %254 = vmatmul.f32.gmra.mxu0 %v216
    %v255 = vpop.f32.mrf.mxu0
    %v256 = vadd.f32 %v213, %v255
    %257 = vdwg.mxu0
    %v258 = vmax.f32 %v236, 0.0
    %v259 = vmax.f32 %v256, 0.0
    %v260 = vadd.f32 %v258, %v179
    %v261 = vadd.f32 %v259, %v180
    %262 = vrot.lane.b32.xlu0 %v260, 8
    %v263 = vpop.permute.xlu0 %262
    %264 = vrot.lane.b32.xlu0 %v261, 8
    %v265 = vpop.permute.xlu0 %264
    %vm266 = vcmp.lt.s32.totalorder %v16, 8
    %v267 = vsel %vm266, %v263, %v265
    %v268 = vsel %vm266, %v265, %v263
    %vm269 = vcmp.ge.s32.totalorder %v16, 8
    %v270 = vsel %vm269, 1, 0
    %v271 = vperm.slane %v270, 0
    %vm272 = vcmp.eq.s32.totalorder %v271, 1
    %v273 = vsel %vm272, %v268, 0.0
    %v274 = vsel %vm272, %v267, 0.0
    %275 = vrot.lane.b32.xlu0 %v260, 120
    %v276 = vpop.permute.xlu0 %275
    %277 = vrot.lane.b32.xlu0 %v261, 120
    %v278 = vpop.permute.xlu0 %277
    %vm279 = vcmp.lt.s32.totalorder %v16, 120
    %v280 = vsel %vm279, %v276, %v278
    %v281 = vsel %vm279, %v278, %v276
    %v282 = vsel %vm279, 1, 0
    %v283 = vperm.slane %v282, 0
    %vm284 = vcmp.eq.s32.totalorder %v283, 1
    %v285 = vsel %vm284, %v280, 0.0
    %v286 = vsel %vm284, %v281, 0.0
    %s287 = scalar_lea.vmem %s1, 24
    %v288 = vld [vmem:[%s287] sm:$0xff]
    %s289 = scalar_lea.vmem %s2, 24
    %v290 = vld [vmem:[%s289] sm:$0xff]
    %292 = vset.pattern.permute.xlu0 0
    %293 = vperm.xlu0 %292, %v290
    %v294 = vpop.permute.xlu0 %293
    %v297 = vsel %vm52, %v288, 0
    %299 = vmatpush.msra.mxu0 0.0
    %300 = vmatpush.msra.mxu0 0.0
    %301 = vmatpush.msra.mxu0 0.0
    %302 = vmatpush.msra.mxu0 0.0
    %303 = vmatpush.msra.mxu0 0.0
    %304 = vmatpush.msra.mxu0 0.0
    %305 = vmatpush.msra.mxu0 0.0
    %306 = vmatpush.msra.mxu0 0.0
    %307 = vmatpush.msra.mxu0 0.0
    %308 = vmatpush.msra.mxu0 0.0
    %309 = vmatpush.msra.mxu0 0.0
    %310 = vmatpush.msra.mxu0 0.0
    %311 = vmatpush.msra.mxu0 0.0
    %312 = vmatpush.msra.mxu0 %v285
    %313 = vmatpush.msra.mxu0 %v260
    %314 = vmatpush.msra.mxu0 %v273
    %315 = vmatmul.f32.gmra.mxu0 %v297
    %v316 = vpop.f32.mrf.mxu0
    %v317 = vadd.f32 %v294, %v316
    %318 = vdwg.mxu0
    %319 = vmatpush.msra.mxu0 0.0
    %320 = vmatpush.msra.mxu0 0.0
    %321 = vmatpush.msra.mxu0 0.0
    %322 = vmatpush.msra.mxu0 0.0
    %323 = vmatpush.msra.mxu0 0.0
    %324 = vmatpush.msra.mxu0 0.0
    %325 = vmatpush.msra.mxu0 0.0
    %326 = vmatpush.msra.mxu0 0.0
    %327 = vmatpush.msra.mxu0 0.0
    %328 = vmatpush.msra.mxu0 0.0
    %329 = vmatpush.msra.mxu0 0.0
    %330 = vmatpush.msra.mxu0 0.0
    %331 = vmatpush.msra.mxu0 0.0
    %332 = vmatpush.msra.mxu0 %v286
    %333 = vmatpush.msra.mxu0 %v261
    %334 = vmatpush.msra.mxu0 %v274
    %335 = vmatmul.f32.gmra.mxu0 %v297
    %v336 = vpop.f32.mrf.mxu0
    %v337 = vadd.f32 %v294, %v336
    %338 = vdwg.mxu0
    %v339 = vmax.f32 %v317, 0.0
    %v340 = vmax.f32 %v337, 0.0
    %v341 = vadd.f32 %v339, %v260
    %v342 = vadd.f32 %v340, %v261
    %343 = vst [vmem:[#allocation2] sm:$0xff] %v341
    %s344 = scalar_lea.vmem [#allocation2], 8
    %345 = vst [vmem:[%s344] sm:$0xff] %v342
    // Predicated region
    $region14: #{dilated_tcn_pallas.1} parent=1 // pred_check
      _
    $region15: #{dilated_tcn_pallas.1} parent=1 // pred_check_branch
      %347 = sbr.rel (0) target = $region17
    $region16: #{dilated_tcn_pallas.1} parent=1 // pred_region
      %349 = vsyncadd [#allocation3], 0
      %s350 = sshll.u32 [#allocation2], 4
      %s351 = int_to_ptr.vmem [resolvable:$true] %s350
      %s352 = sshll.u32 %s3, 4
      %s353 = int_to_ptr.hbm [resolvable:$true] %s352
      %358 = dma.vmem_to_hbm [thread:$0]  %s351, 256, %s353, [#allocation3], 128, 128, 8
    $region17: #{dilated_tcn_pallas.1} parent=1 // pred_fallthru
      _
    // Predicated region
    $region18: #{dilated_tcn_pallas.1} parent=1 // pred_check
      _
    $region19: #{dilated_tcn_pallas.1} parent=1 // pred_check_branch
      %360 = sbr.rel (0) target = $region21
    $region20: #{dilated_tcn_pallas.1} parent=1 // pred_region
      %362 = dma.done [#allocation3], 256
    $region21: #{dilated_tcn_pallas.1} parent=1 // pred_fallthru
      _
    %363 = vsyncpa [#allocation3], 1

</llo_original>
